<compile_context>
chip_gen: v7x
topology: tpu7x:2x2x1
jax: 0.10.0
libtpu: 0.0.40
codegen_flags: <defaults>
</compile_context>

<pallas_src>
import math

import jax
import jax.numpy as jnp
from jax.experimental import pallas as pl
from jax.experimental.pallas import tpu as pltpu


# ----------------------------------------------------------------------------
# Deterministic parameter construction (mirrors BatchSTFT.__init__)
# ----------------------------------------------------------------------------
def build_window(n_fft, window_fn="hann"):
    n = jnp.arange(n_fft, dtype=jnp.float32)
    if window_fn == "hann":
        # periodic Hann window (torch.hann_window default)
        return 0.5 - 0.5 * jnp.cos(2.0 * math.pi * n / n_fft)
    raise ValueError(f"unsupported window_fn {window_fn}")


def build_fourier_bases(n_fft, normalize=False):
    k = jnp.arange(n_fft, dtype=jnp.float32)[:, None]
    n = jnp.arange(n_fft, dtype=jnp.float32)[None, :]
    ang = 2.0 * math.pi * k * n / n_fft
    cos_bases = jnp.cos(ang)
    sin_bases = jnp.sin(ang)
    if normalize:
        cos_bases = cos_bases / math.sqrt(n_fft)
        sin_bases = sin_bases / math.sqrt(n_fft)
    return cos_bases, sin_bases


def build_stft_bases(n_fft, window_fn="hann", normalize=False):
    n_bins = n_fft // 2 + 1
    window = build_window(n_fft, window_fn=window_fn)
    cos_bases, sin_bases = build_fourier_bases(n_fft, normalize=normalize)
    cos_bases = cos_bases[:n_bins] * window
    sin_bases = -sin_bases[:n_bins] * window
    # PyTorch keeps (2*n_bins, 1, n_fft) for conv1d; we drop the channel dim.
    return jnp.concatenate([cos_bases, sin_bases], axis=0)  # (2*n_bins, n_fft)


# ----------------------------------------------------------------------------
# Helpers
# ----------------------------------------------------------------------------
def _round_up(x, m):
    return -(-x // m) * m


def _pick_n_tile(n_pad, cap=512):
    """Largest multiple of 128 <= cap that divides n_pad (n_pad is a 128-multiple)."""
    t = min(cap, n_pad)
    t -= t % 128
    while t >= 128:
        if n_pad % t == 0:
            return t
        t -= 128
    return 128


# ----------------------------------------------------------------------------
# Pallas kernel: build a tile of frames in VMEM, then frames @ bases^T on MXU
# ----------------------------------------------------------------------------
def _stft_frames_matmul_kernel(x3_ref, basesT_ref, out_ref, frames_ref):
    # x3_ref:     (1, rows, hop_w)   padded signal of this batch, viewed row-wise
    # basesT_ref: (n_fft, TN)        current column-tile of bases^T (resident)
    # out_ref:    (1, TF, TN)        output tile
    # frames_ref: (TF, n_fft)        scratch: frame tile (persists across nj)
    fi = pl.program_id(1)
    nj = pl.program_id(2)

    tf, n_fft = frames_ref.shape
    hop_w = x3_ref.shape[2]
    r = n_fft // hop_w  # number of hop-rows per frame (static)

    # Build the frame tile only once per frame tile (nj axis is "arbitrary",
    # so nj == 0 is always executed first on whichever core owns this tile).
    @pl.when(nj == 0)
    def _build_frames():
        row0 = fi * tf
        for j in range(r):
            # frame f, columns [j*hop_w, (j+1)*hop_w) == signal rows row0+f+j
            frames_ref[:, j * hop_w:(j + 1) * hop_w] = (
                x3_ref[0, pl.ds(row0 + j, tf), :].astype(frames_ref.dtype)
            )

    out_ref[0] = jnp.dot(
        frames_ref[...], basesT_ref[...], preferred_element_type=jnp.float32
    ).astype(out_ref.dtype)


def batch_stft(x, bases, n_fft, hop_length, compute_dtype=jnp.float32):
    """x: (B, T) float32; bases: (2*n_bins, n_fft).

    Returns (B, n_bins, n_frames, 2) float32, matching BatchSTFT.forward.
    Set compute_dtype=jnp.bfloat16 for ~3x MXU throughput (f32 accumulation is
    kept; expect ~1e-2 relative error vs the f32 reference).
    """
    B, T = x.shape
    n_bins = n_fft // 2 + 1
    n_out = 2 * n_bins

    # --- padding / frame count exactly as in the PyTorch forward -------------
    padding = (hop_length - (T - n_fft) % hop_length) % hop_length + 2 * n_fft
    pad_left = padding // 2
    Tp = T + padding
    n_frames = (Tp - n_fft) // hop_length + 1

    # --- tile sizes -----------------------------------------------------------
    TF = min(256, _round_up(n_frames, 8))          # frame (M) tile, MXU friendly
    F_pad = _round_up(n_frames, TF)
    N_pad = _round_up(n_out, 128)                  # lane-dense output width
    TN = _pick_n_tile(N_pad, cap=512)

    # --- "row view" of the padded signal: framing without an HBM gather ------
    if n_fft % hop_length == 0:
        # Signal reshaped to (rows, hop); frame g = rows g .. g+r-1 concatenated.
        r = n_fft // hop_length
        hop_w = hop_length
        rows = F_pad + r - 1
        total = rows * hop_w                       # >= torch-padded length
        xp = jnp.pad(x, ((0, 0), (pad_left, total - T - pad_left)))
        x3 = xp.reshape(B, rows, hop_w)
    else:
        # TODO(synk): hop does not divide n_fft -> framing falls back to an XLA
        # gather; the kernel then consumes pre-framed rows (r == 1).
        hop_w = n_fft
        rows = F_pad
        need = (F_pad - 1) * hop_length + n_fft
        xp = jnp.pad(x, ((0, 0), (pad_left, need - T - pad_left)))
        idx = (jnp.arange(F_pad)[:, None] * hop_length
               + jnp.arange(n_fft)[None, :])
        x3 = xp[:, idx]                            # (B, F_pad, n_fft)

    # --- bases^T, zero-padded to a 128-multiple column count ------------------
    basesT = jnp.pad(bases.T, ((0, 0), (0, N_pad - n_out)))   # (n_fft, N_pad)
    # TODO(synk): for very large n_fft (>= ~4096) add a K grid axis + f32
    # accumulator so bases^T column tiles need not hold the full n_fft rows.

    x3c = x3.astype(compute_dtype)
    basesTc = basesT.astype(compute_dtype)

    grid = (B, F_pad // TF, N_pad // TN)
    itemsize = jnp.dtype(compute_dtype).itemsize
    cost = pl.CostEstimate(
        flops=2 * B * F_pad * n_fft * N_pad,
        bytes_accessed=(B * rows * hop_w * itemsize
                        + n_fft * N_pad * itemsize
                        + B * F_pad * N_pad * 4),
        transcendentals=0,
    )

    out3 = pl.pallas_call(
        _stft_frames_matmul_kernel,
        out_shape=jax.ShapeDtypeStruct((B, F_pad, N_pad), jnp.float32),
        grid=grid,
        in_specs=[
            # whole padded signal row of batch b: resident across fi / nj
            pl.BlockSpec((1, rows, hop_w), lambda b, fi, nj: (b, 0, 0)),
            # bases^T column tile: resident across b / fi
            pl.BlockSpec((n_fft, TN), lambda b, fi, nj: (0, nj)),
        ],
        out_specs=pl.BlockSpec((1, TF, TN), lambda b, fi, nj: (b, fi, nj)),
        scratch_shapes=[pltpu.VMEM((TF, n_fft), compute_dtype)],
        compiler_params=pltpu.CompilerParams(
            dimension_semantics=("parallel", "parallel", "arbitrary"),
            vmem_limit_bytes=48 * 1024 * 1024,
        ),
        cost_estimate=cost,
    )(x3c, basesTc)

    # --- epilogue: drop padding, split real/imag ------------------------------
    out = out3[:, :n_frames, :n_out]               # (B, n_frames, 2*n_bins)
    out = jnp.transpose(out, (0, 2, 1))            # (B, 2*n_bins, n_frames)
    real = out[:, :n_bins]
    imag = out[:, n_bins:]
    return jnp.stack([real, imag], axis=3)         # (B, n_bins, n_frames, 2)


if __name__ == "__main__":
    # Small shapes consistent with the module: batch=2, T=64, n_fft=16, hop=8.
    n_fft = 16
    hop_length = n_fft // 2
    B, T = 2, 64

    key = jax.random.PRNGKey(0)
    x = jax.random.normal(key, (B, T), dtype=jnp.float32)

    bases = build_stft_bases(n_fft, window_fn="hann", normalize=False)

    out = jax.block_until_ready(batch_stft(x, bases, n_fft, hop_length))

    # Pure-JAX reference (torch-equivalent framing + matmul) for a sanity check.
    n_bins = n_fft // 2 + 1
    padding = (hop_length - (T - n_fft) % hop_length) % hop_length + 2 * n_fft
    xp = jnp.pad(x, ((0, 0), (padding // 2, padding - padding // 2)))
    n_frames = (xp.shape[1] - n_fft) // hop_length + 1
    fidx = jnp.arange(n_frames)[:, None] * hop_length + jnp.arange(n_fft)[None, :]
    frames_ref = xp[:, fidx]                                 # (B, n_frames, n_fft)
    ref = jnp.einsum("bfk,ck->bcf", frames_ref, bases)       # (B, 2*n_bins, n_frames)
    ref = jnp.stack([ref[:, :n_bins], ref[:, n_bins:]], axis=3)

    assert out.shape == (B, n_bins, n_frames, 2), out.shape
    assert jnp.allclose(out, ref, atol=1e-4, rtol=1e-4), \
        float(jnp.max(jnp.abs(out - ref)))
    print("KERNEL_OK")
</pallas_src>

<mosaic_0001>
module attributes {stable_mosaic.version = 11 : i64} {
  func.func @_stft_frames_matmul_kernel(%arg0: i32, %arg1: i32, %arg2: i32, %arg3: memref<1x17x8xf32, #tpu.memory_space<vmem>>, %arg4: memref<16x128xf32, #tpu.memory_space<vmem>>, %arg5: memref<1x16x128xf32, #tpu.memory_space<vmem>>, %arg6: memref<16x16xf32, #tpu.memory_space<vmem>>) attributes {dimension_semantics = [#tpu.dimension_semantics<parallel>, #tpu.dimension_semantics<parallel>, #tpu.dimension_semantics<arbitrary>], iteration_bounds = array<i64: 2, 1, 1>, scalar_prefetch = 0 : i64, scratch_operands = 1 : i64, tpu.core_type = #tpu.core_type<tc>, window_params = [{transform_indices = @transform_0, window_bounds = array<i64: 1, 17, 8>}, {transform_indices = @transform_1, window_bounds = array<i64: 16, 128>}, {transform_indices = @transform_2, window_bounds = array<i64: 1, 16, 128>}]} {
    %c0_i32 = arith.constant 0 : i32
    %0 = arith.cmpi eq, %arg2, %c0_i32 : i32
    %1 = arith.extui %0 : i1 to i32
    %c0_i32_0 = arith.constant 0 : i32
    %2 = arith.cmpi ne, %1, %c0_i32_0 : i32
    scf.if %2 {
      %c16_i32 = arith.constant 16 : i32
      %9 = arith.muli %arg1, %c16_i32 : i32
      %c0_i32_7 = arith.constant 0 : i32
      %10 = arith.addi %9, %c0_i32_7 : i32
      %c0_8 = arith.constant 0 : index
      %11 = arith.index_cast %10 : i32 to index
      %c0_9 = arith.constant 0 : index
      %12 = vector.load %arg3[%c0_8, %11, %c0_9] : memref<1x17x8xf32, #tpu.memory_space<vmem>>, vector<1x16x8xf32>
      %13 = vector.shape_cast %12 : vector<1x16x8xf32> to vector<16x8xf32>
      %c0_10 = arith.constant 0 : index
      %c0_11 = arith.constant 0 : index
      %14 = vector.load %arg6[%c0_10, %c0_11] : memref<16x16xf32, #tpu.memory_space<vmem>>, vector<16x8xf32>
      tpu.vector_store %arg6[%c0_10, %c0_11], %13 {strides = array<i32>} : memref<16x16xf32, #tpu.memory_space<vmem>>, vector<16x8xf32>,
      %c1_i32 = arith.constant 1 : i32
      %15 = arith.addi %9, %c1_i32 : i32
      %c0_12 = arith.constant 0 : index
      %16 = arith.index_cast %15 : i32 to index
      %c0_13 = arith.constant 0 : index
      %17 = vector.load %arg3[%c0_12, %16, %c0_13] : memref<1x17x8xf32, #tpu.memory_space<vmem>>, vector<1x16x8xf32>
      %18 = vector.shape_cast %17 : vector<1x16x8xf32> to vector<16x8xf32>
      %c0_14 = arith.constant 0 : index
      %c8 = arith.constant 8 : index
      %19 = vector.load %arg6[%c0_14, %c8] : memref<16x16xf32, #tpu.memory_space<vmem>>, vector<16x8xf32>
      tpu.vector_store %arg6[%c0_14, %c8], %18 {strides = array<i32>} : memref<16x16xf32, #tpu.memory_space<vmem>>, vector<16x8xf32>,
    } else {
    }
    %c0 = arith.constant 0 : index
    %c0_1 = arith.constant 0 : index
    %3 = vector.load %arg6[%c0, %c0_1] : memref<16x16xf32, #tpu.memory_space<vmem>>, vector<16x16xf32>
    %c0_2 = arith.constant 0 : index
    %c0_3 = arith.constant 0 : index
    %4 = vector.load %arg4[%c0_2, %c0_3] : memref<16x128xf32, #tpu.memory_space<vmem>>, vector<16x128xf32>
    %cst = arith.constant dense<0.000000e+00> : vector<16x128xf32>
    %5 = tpu.matmul %3, %4, %cst {dimension_numbers = #tpu.dot_dimension_numbers<[1], [0], [0], [1], [0, 0, 1, 1], [], []>} : vector<16x16xf32>, vector<16x128xf32>, vector<16x128xf32> -> vector<16x128xf32>
    %c0_4 = arith.constant 0 : index
    %c0_5 = arith.constant 0 : index
    %c0_6 = arith.constant 0 : index
    %6 = vector.load %arg5[%c0_4, %c0_5, %c0_6] : memref<1x16x128xf32, #tpu.memory_space<vmem>>, vector<1x16x128xf32>
    %7 = vector.shape_cast %6 : vector<1x16x128xf32> to vector<16x128xf32>
    %8 = vector.shape_cast %5 : vector<16x128xf32> to vector<1x16x128xf32>
    tpu.vector_store %arg5[%c0_4, %c0_5, %c0_6], %8 {strides = array<i32>} : memref<1x16x128xf32, #tpu.memory_space<vmem>>, vector<1x16x128xf32>,
    return
  }
  func.func @transform_0(%arg0: i32, %arg1: i32, %arg2: i32) -> (i32, i32, i32) {
    %c0_i32 = arith.constant 0 : i32
    %c0_i32_0 = arith.constant 0 : i32
    %c0_i32_1 = arith.constant 0 : i32
    return %arg0, %c0_i32, %c0_i32_0 : i32, i32, i32
  }
  func.func @transform_1(%arg0: i32, %arg1: i32, %arg2: i32) -> (i32, i32) {
    %c0_i32 = arith.constant 0 : i32
    %c0_i32_0 = arith.constant 0 : i32
    return %c0_i32, %arg2 : i32, i32
  }
  func.func @transform_2(%arg0: i32, %arg1: i32, %arg2: i32) -> (i32, i32, i32) {
    %c0_i32 = arith.constant 0 : i32
    return %arg0, %arg1, %arg2 : i32, i32, i32
  }
}

</mosaic_0001>

<llo_original>
// kernel: tpu_custom_call.1
$region0: #{tpu_custom_call.1}
  #allocation0 [shape = 'u32[]', space=smem, size = 0x4, offset = 0x4, fixed_abs, tag = 'smem constant byte address 0x4 - core index']
  #allocation1 [shape = 'u32[144,128]{1,0:T(1,128)}', space=vmem, size = 0x12000, scoped, tag = 'internal scratch']
  #allocation2 [shape = 'f32[16,16]{1,0:T(8,128)}', space=vmem, size = 0x2000, scoped, tag = 'scratch operand']
  %s0 = inlined_call_operand.vmem [shape: f32[2,17,8], index: 0, kind: input, shape index: {}]
  %s1 = inlined_call_operand.vmem [shape: f32[16,128], index: 1, kind: input, shape index: {}]
  %s2 = inlined_call_operand.hbm [shape: f32[2,16,128], index: 2, kind: output, shape index: {}]
  %s3 = sld [smem:[#allocation0]]
  $region45: #{tpu_custom_call.1} parent=0
    _
  %s5 = ssub.s32 1, %s3
  %s6 = scalar_select 0, %s5, %s3
  $region1: #{tpu_custom_call.1} parent=0
    #allocation3 [shape = 'u8[16384]{0}', space=vmem, size = 0x4000, scoped, tag = 'output window, operand 0']
    #allocation4 [shape = 's32[2]{0}', space=sflag, size = 0x8, scoped, tag = 'scoped memory for tpu_custom_call.1']
    %7 = vsyncpa [#allocation4], 0
    %s8 = scalar_lea.sflag [#allocation4], 1
    %9 = vsyncpa %s8, 0
    loop: start=0, step=1, limit=4
    $region2: #{tpu_custom_call.1} parent=1 // loop_pre_header
      _
    $region3: #{tpu_custom_call.1} parent=1 // loop_header
      %s11 = sphi 0, %s15
      %p12 = scmp.ge.s32.totalorder %s11, 4
      %s18 = sphi 0, %s37
      %s19 = sphi 0, %s33
      %s20 = sphi 0, %s29
      %s21 = sphi 0, %s18
      %s22 = sphi 0, %s19
      %s23 = sphi 0, %s20
      %s24 = sphi 0, %s21
      %s25 = sphi 0, %s22
      %s26 = sphi 0, %s23
      %s40 = sphi 0, %s42
      %s43 = sphi 0, %s40
      %s44 = sphi 0, %s43
      %s60 = sphi 0, %s44
      %s66 = sphi 0, %s68
      %s69 = sphi 0, %s66
      %s70 = sphi 0, %s69
      %s86 = sphi 0, %s70
      %s96 = sphi 0, %s98
      %s99 = sphi 0, %s96
      %s100 = sphi 0, %s99
      %s116 = sphi 0, %s100
    $region4: #{tpu_custom_call.1} parent=1 // loop_header_branch
      %14 = sbr.rel (%p12) target = $region8
    $region5: #{tpu_custom_call.1} parent=1 // loop_body
      %s16 = ssub.s32 %s11, 1
      %s17 = ssub.s32 %s11, 2
      %s27 = sadd.s32 1, %s20
      %p28 = scmp.ge.s32.totalorder %s27, 1
      %s29 = scalar_select %p28, 0, %s27
      %s30 = sadd.s32 1, %s19
      %s31 = scalar_select %p28, %s30, %s19
      %p32 = scmp.ge.s32.totalorder %s31, 1
      %s33 = scalar_select %p32, 0, %s31
      %s34 = sadd.s32 1, %s18
      %s35 = scalar_select %p32, %s34, %s18
      %p36 = scmp.ge.s32.totalorder %s35, 2
      %s37 = scalar_select %p36, 0, %s35
      %s38 = ssub.s32 %s18, %s37
      %p39 = scmp.eq.s32.totalorder %s38, 0
      %s41 = sadd.s32 %s40, 1
      %s42 = scalar_select %p39, %s40, %s41
      %p45 = pneg %p39
      %p46 = scmp.eq.s32.totalorder %s11, 1
      %p47 = por %p45, %p46
      %p48 = scmp.ne.s32.totalorder %s40, %s43
      %p49 = scmp.eq.s32.totalorder %s11, 0
      %p50 = por %p48, %p49
      %p51 = scmp.ne.s32.totalorder %s40, %s43
      %p52 = scmp.eq.s32.totalorder %s16, 1
      %p53 = por %p51, %p52
      %p54 = scmp.ne.s32.totalorder %s43, %s44
      %p55 = scmp.eq.s32.totalorder %s16, 0
      %p56 = por %p54, %p55
      %p57 = scmp.ne.s32.totalorder %s43, %s44
      %p58 = scmp.eq.s32.totalorder %s17, 1
      %p59 = por %p57, %p58
      %p61 = scmp.ne.s32.totalorder %s44, %s60
      %p62 = scmp.eq.s32.totalorder %s17, 0
      %p63 = por %p61, %p62
      %s64 = ssub.s32 %s20, %s29
      %p65 = scmp.eq.s32.totalorder %s64, 0
      %s67 = sadd.s32 %s66, 1
      %s68 = scalar_select %p65, %s66, %s67
      %p71 = pneg %p65
      %p72 = scmp.eq.s32.totalorder %s11, 1
      %p73 = por %p71, %p72
      %p74 = scmp.ne.s32.totalorder %s66, %s69
      %p75 = scmp.eq.s32.totalorder %s11, 0
      %p76 = por %p74, %p75
      %p77 = scmp.ne.s32.totalorder %s66, %s69
      %p78 = scmp.eq.s32.totalorder %s16, 1
      %p79 = por %p77, %p78
      %p80 = scmp.ne.s32.totalorder %s69, %s70
      %p81 = scmp.eq.s32.totalorder %s16, 0
      %p82 = por %p80, %p81
      %p83 = scmp.ne.s32.totalorder %s69, %s70
      %p84 = scmp.eq.s32.totalorder %s17, 1
      %p85 = por %p83, %p84
      %p87 = scmp.ne.s32.totalorder %s70, %s86
      %p88 = scmp.eq.s32.totalorder %s17, 0
      %p89 = por %p87, %p88
      %s90 = ssub.s32 %s18, %s37
      %s91 = ssub.s32 %s19, %s33
      %s92 = sor.u32 %s90, %s91
      %s93 = ssub.s32 %s20, %s29
      %s94 = sor.u32 %s92, %s93
      %p95 = scmp.eq.s32.totalorder %s94, 0
      %s97 = sadd.s32 %s96, 1
      %s98 = scalar_select %p95, %s96, %s97
      %p101 = pneg %p95
      %p102 = scmp.eq.s32.totalorder %s11, 1
      %p103 = por %p101, %p102
      %p104 = scmp.ne.s32.totalorder %s96, %s99
      %p105 = scmp.eq.s32.totalorder %s11, 0
      %p106 = por %p104, %p105
      %p107 = scmp.ne.s32.totalorder %s96, %s99
      %p108 = scmp.eq.s32.totalorder %s16, 1
      %p109 = por %p107, %p108
      %p110 = scmp.ne.s32.totalorder %s99, %s100
      %p111 = scmp.eq.s32.totalorder %s16, 0
      %p112 = por %p110, %p111
      %p113 = scmp.ne.s32.totalorder %s99, %s100
      %p114 = scmp.eq.s32.totalorder %s17, 1
      %p115 = por %p113, %p114
      %p117 = scmp.ne.s32.totalorder %s100, %s116
      %p118 = scmp.eq.s32.totalorder %s17, 0
      %p119 = por %p117, %p118
      %p120 = scmp.le.s32.totalorder 1, %s11
      %p121 = scmp.lt.s32.totalorder %s11, 3
      %p122 = pnand %p120, %p121
      %p123 = pneg %p122
      // Predicated region
      $region9: #{tpu_custom_call.1} parent=5 // pred_check
        _
      $region10: #{tpu_custom_call.1} parent=5 // pred_check_branch
        %125 = sbr.rel (%p122) target = $region12
      $region11: #{tpu_custom_call.1} parent=5 // pred_region
        %s126 = ssub.s32 %s11, 1
        // Predicated region
        $region13: #{tpu_custom_call.1} parent=11 // pred_check
          %p127 = pneg %p82
        $region14: #{tpu_custom_call.1} parent=11 // pred_check_branch
          %129 = sbr.rel (%p127) target = $region16
        $region15: #{tpu_custom_call.1} parent=11 // pred_region
          %p130 = scmp.lt.s32.totalorder %s23, 0
          %s131 = scalar_select %p130, %s23, 0
          %s132 = smul.addr %s131, 8
          %s133 = scalar_lea.vmem %s1, %s132
        $region16: #{tpu_custom_call.1} parent=11 // pred_fallthru
          _
      $region12: #{tpu_custom_call.1} parent=5 // pred_fallthru
        _
      %p134 = scmp.lt.s32.totalorder %s11, 2
      // Predicated region
      $region17: #{tpu_custom_call.1} parent=5 // pred_check
        %p135 = pneg %p134
      $region18: #{tpu_custom_call.1} parent=5 // pred_check_branch
        %137 = sbr.rel (%p135) target = $region20
      $region19: #{tpu_custom_call.1} parent=5 // pred_region
        // Predicated region
        $region21: #{tpu_custom_call.1} parent=19 // pred_check
          %p138 = pneg %p50
        $region22: #{tpu_custom_call.1} parent=19 // pred_check_branch
          %140 = sbr.rel (%p138) target = $region24
        $region23: #{tpu_custom_call.1} parent=19 // pred_region
          %p141 = scmp.lt.s32.totalorder %s18, 1
          %s142 = scalar_select %p141, %s18, 1
          %s143 = smul.addr %s142, 3
          %s144 = smul.addr %s143, 8
          %s145 = scalar_lea.vmem %s0, %s144
        $region24: #{tpu_custom_call.1} parent=19 // pred_fallthru
          _
      $region20: #{tpu_custom_call.1} parent=5 // pred_fallthru
        _
      %p146 = scmp.le.s32.totalorder 1, %s11
      %p147 = scmp.lt.s32.totalorder %s11, 3
      %p148 = pnand %p146, %p147
      %p149 = pneg %p148
      // Predicated region
      $region25: #{tpu_custom_call.1} parent=5 // pred_check
        _
      $region26: #{tpu_custom_call.1} parent=5 // pred_check_branch
        %151 = sbr.rel (%p148) target = $region28
      $region27: #{tpu_custom_call.1} parent=5 // pred_region
        %s152 = ssub.s32 %s11, 1
        %p153 = scmp.lt.s32.totalorder %s21, 1
        %s154 = scalar_select %p153, %s21, 1
        %s155 = smul.addr %s154, 3
        %s156 = smul.addr %s155, 8
        %s157 = scalar_lea.vmem %s0, %s156
        %p158 = pneg %p56
        %p159 = pneg %p53
        %p160 = scmp.lt.s32.totalorder %s23, 0
        %s161 = scalar_select %p160, %s23, 0
        %s162 = smul.addr %s161, 8
        %s163 = scalar_lea.vmem %s1, %s162
        %p164 = pneg %p82
        %p165 = pneg %p79
        %p166 = pneg %p112
        %p167 = pneg %p109
        %s168 = sand.u32 %s99, 1
        %s169 = scalar_lea.sflag [#allocation4], %s168
        %s170 = sand.u32 %s99, 1
        %s171 = smul.addr %s170, 16
        %s172 = scalar_lea.vmem [#allocation3], %s171
        %p173 = scmp.lt.s32.totalorder %s21, 1
        %s174 = scalar_select %p173, %s21, 1
        %s175 = smul.addr %s174, 3
        %s176 = smul.addr %s175, 8
        %s177 = scalar_lea.vmem %s0, %s176
        %p178 = scmp.lt.s32.totalorder %s23, 0
        %s179 = scalar_select %p178, %s23, 0
        %s180 = smul.addr %s179, 8
        %s181 = scalar_lea.vmem %s1, %s180
        %s182 = smul.u32 2, %s22
        %p183 = scmp.eq.s32.totalorder %s23, 0
        // Predicated region
        $region29: #{tpu_custom_call.1} parent=27 // pred_check
          %p184 = pneg %p183
        $region30: #{tpu_custom_call.1} parent=27 // pred_check_branch
          %186 = sbr.rel (%p184) target = $region32
        $region31: #{tpu_custom_call.1} parent=27 // pred_region
          %s187 = smul.u32 %s22, 16
          %s188 = scalar_lea.vmem %s177, %s187
          %v189 = vld [vmem:[%s188] sm:$0xff]
          %v190 = vld [vmem:[%s188 + $0x8] sm:$0xff]
          %vm191 = vcmask 64512
          %192 = vst.msk [vmem:[#allocation2] sm:$0xff] %vm191, %v189
          %193 = vst.msk [vmem:[#allocation2 + $0x8] sm:$0xff] %vm191, %v190
          %s194 = sadd.s32 %s187, 1
          %s195 = scalar_lea.vmem %s177, %s194
          %v196 = vld [vmem:[%s195] sm:$0xff]
          %v197 = vld [vmem:[%s195 + $0x8] sm:$0xff]
          %200 = vrot.lane.b32.xlu0 %v196, 8
          %v201 = vpop.permute.xlu0 %200
          %202 = vrot.lane.b32.xlu0 %v197, 8
          %v203 = vpop.permute.xlu0 %202
          %vm206 = vcmask 130112
          %207 = vst.msk [vmem:[#allocation2] sm:$0xff] %vm206, %v201
          %208 = vst.msk [vmem:[#allocation2 + $0x8] sm:$0xff] %vm206, %v203
        $region32: #{tpu_custom_call.1} parent=27 // pred_fallthru
          _
        %v209 = vld [vmem:[#allocation2] sm:$0xff]
        %v210 = vld [vmem:[#allocation2 + $0x8] sm:$0xff]
        %v211 = vld [vmem:[%s181] sm:$0xff]
        %v212 = vld [vmem:[%s181 + $0x8] sm:$0xff]
        %vm213 = vcmask 130048
        %v215 = vsel %vm213, %v209, 0
        %v218 = vsel %vm213, %v210, 0
        %220 = vmatprep.subr.mxu0 0.0
        %221 = vmatpush1.msra.mxu0 %v211
        %222 = vmatprep.subr.mxu0 0.0
        %223 = vmatpush1.msra.mxu0 %v212
        %224 = vmatprep.subr.mxu0 0.0
        %225 = vmatpush1.msra.mxu0 0.0
        %226 = vmatprep.subr.mxu0 0.0
        %227 = vmatpush1.msra.mxu0 0.0
        %228 = vmatprep.subr.mxu0 0.0
        %229 = vmatpush1.msra.mxu0 0.0
        %230 = vmatprep.subr.mxu0 0.0
        %231 = vmatpush1.msra.mxu0 0.0
        %232 = vmatprep.subr.mxu0 0.0
        %233 = vmatpush1.msra.mxu0 0.0
        %234 = vmatprep.subr.mxu0 0.0
        %235 = vmatpush1.msra.mxu0 0.0
        %236 = vmatprep.subr.mxu0 0.0
        %237 = vmatpush1.msra.mxu0 0.0
        %238 = vmatprep.subr.mxu0 0.0
        %239 = vmatpush1.msra.mxu0 0.0
        %240 = vmatprep.subr.mxu0 0.0
        %241 = vmatpush1.msra.mxu0 0.0
        %242 = vmatprep.subr.mxu0 0.0
        %243 = vmatpush1.msra.mxu0 0.0
        %244 = vmatprep.subr.mxu0 0.0
        %245 = vmatpush1.msra.mxu0 0.0
        %246 = vmatprep.subr.mxu0 0.0
        %247 = vmatpush1.msra.mxu0 0.0
        %248 = vmatprep.subr.mxu0 0.0
        %249 = vmatpush1.msra.mxu0 0.0
        %250 = vmatprep.subr.mxu0 0.0
        %251 = vmatpush1.msra.mxu0 0.0
        %252 = vmatprep.subr.mxu0 0.0
        %253 = vmatpush1.msra.mxu0 0.0
        %254 = vmatprep.subr.mxu0 0.0
        %255 = vmatpush1.msra.mxu0 0.0
        %256 = vmatprep.subr.mxu0 0.0
        %257 = vmatpush1.msra.mxu0 0.0
        %258 = vmatprep.subr.mxu0 0.0
        %259 = vmatpush1.msra.mxu0 0.0
        %260 = vmatprep.subr.mxu0 0.0
        %261 = vmatpush1.msra.mxu0 0.0
        %262 = vmatprep.subr.mxu0 0.0
        %263 = vmatpush1.msra.mxu0 0.0
        %264 = vmatprep.subr.mxu0 0.0
        %265 = vmatpush1.msra.mxu0 0.0
        %266 = vmatprep.subr.mxu0 0.0
        %267 = vmatpush1.msra.mxu0 0.0
        %268 = vmatprep.subr.mxu0 0.0
        %269 = vmatpush1.msra.mxu0 0.0
        %270 = vmatprep.subr.mxu0 0.0
        %271 = vmatpush1.msra.mxu0 0.0
        %272 = vmatprep.subr.mxu0 0.0
        %273 = vmatpush1.msra.mxu0 0.0
        %274 = vmatprep.subr.mxu0 0.0
        %275 = vmatpush1.msra.mxu0 0.0
        %276 = vmatprep.subr.mxu0 0.0
        %277 = vmatpush1.msra.mxu0 0.0
        %278 = vmatprep.subr.mxu0 0.0
        %279 = vmatpush1.msra.mxu0 0.0
        %280 = vmatprep.subr.mxu0 0.0
        %281 = vmatpush1.msra.mxu0 0.0
        %282 = vmatprep.subr.mxu0 0.0
        %283 = vmatpush1.msra.mxu0 0.0
        %284 = vmatprep.mubr.f32.mxu0 0.0
        %285 = vmatmul.mubr.f32.gmra.mrb[0].mxu0 %v215
        %v286 = vpop.f32.mrb[0].mxu0
        %v287 = vadd.f32 0.0, %v286
        %v288 = vpop.f32.mrb[0].mxu0
        %289 = vmatprep.mubr.f32.mxu0 0.0
        %290 = vmatmul.mubr.f32.gmra.mrb[0].mxu0 %v218
        %v291 = vpop.f32.mrb[0].mxu0
        %v292 = vadd.f32 0.0, %v291
        %v293 = vpop.f32.mrb[0].mxu0
        %294 = vdwg.mxu0
        %295 = vst [vmem:[%s172] sm:$0xff] %v287
        %296 = vst [vmem:[%s172 + $0x8] sm:$0xff] %v292
        %s297 = sand.u32 %s99, 1
        %s298 = scalar_lea.sflag [#allocation4], %s297
        %s299 = sand.u32 %s99, 1
        %s300 = smul.addr %s299, 16
        %s301 = scalar_lea.vmem [#allocation3], %s300
        // Predicated region
        $region33: #{tpu_custom_call.1} parent=27 // pred_check
          %p302 = pneg %p109
        $region34: #{tpu_custom_call.1} parent=27 // pred_check_branch
          %304 = sbr.rel (%p302) target = $region36
        $region35: #{tpu_custom_call.1} parent=27 // pred_region
          %s305 = smul.u32 2, %s22
          %s307 = ssub.s32 256, 256
          %308 = vsyncadd %s298, %s307
          %s309 = sadd.s32 %s23, %s305
          %s310 = smul.addr %s21, 2
          %s311 = sadd.s32 %s309, %s310
          %s312 = smul.addr %s311, 128
          %s313 = scalar_lea.hbm %s2, %s312
          %s314 = sshll.u32 %s301, 4
          %s315 = int_to_ptr.vmem [resolvable:$true] %s314
          %320 = dma.vmem_to_hbm [thread:$0]  %s315, 256, %s313, %s298, 128, 128, 8
        $region36: #{tpu_custom_call.1} parent=27 // pred_fallthru
          _
      $region28: #{tpu_custom_call.1} parent=5 // pred_fallthru
        _
      %p321 = scmp.le.s32.totalorder 2, %s11
      // Predicated region
      $region37: #{tpu_custom_call.1} parent=5 // pred_check
        %p322 = pneg %p321
      $region38: #{tpu_custom_call.1} parent=5 // pred_check_branch
        %324 = sbr.rel (%p322) target = $region40
      $region39: #{tpu_custom_call.1} parent=5 // pred_region
        %s325 = ssub.s32 %s11, 2
        // Predicated region
        $region41: #{tpu_custom_call.1} parent=39 // pred_check
          %p326 = pneg %p115
        $region42: #{tpu_custom_call.1} parent=39 // pred_check_branch
          %328 = sbr.rel (%p326) target = $region44
        $region43: #{tpu_custom_call.1} parent=39 // pred_region
          %s329 = sand.u32 %s100, 1
          %s330 = scalar_lea.sflag [#allocation4], %s329
          %s331 = sand.u32 %s100, 1
          %s332 = smul.addr %s331, 16
          %s333 = scalar_lea.vmem [#allocation3], %s332
          %334 = dma.done %s330, 256
        $region44: #{tpu_custom_call.1} parent=39 // pred_fallthru
          _
      $region40: #{tpu_custom_call.1} parent=5 // pred_fallthru
        _
    $region6: #{tpu_custom_call.1} parent=1 // loop_footer
      %s15 = sadd.s32 1, %s11
    $region7: #{tpu_custom_call.1} parent=1 // loop_footer_branch
      %10 = sbr.rel target = $region3
    $region8: #{tpu_custom_call.1} parent=1 // loop_exit
      _
    %335 = vsyncpa [#allocation4], 1
    %s336 = scalar_lea.sflag [#allocation4], 1
    %337 = vsyncpa %s336, 1

</llo_original>
